<compile_context>
chip_gen: v5e
topology: v5e:2x2
jax: 0.10.0
libtpu: 0.0.40
codegen_flags: <defaults>
</compile_context>

<pallas_src>
import functools

import jax
import jax.numpy as jnp
from jax import lax
from jax.experimental import pallas as pl
from jax.experimental.pallas import tpu as pltpu


def _round_up(x, m):
    return ((x + m - 1) // m) * m


def _round_down(x, m):
    return (x // m) * m


def _linear_kernel(x_ref, w_ref, b_ref, o_ref):
    # x_ref: (tm, K)   w_ref: (tn, K)  (PyTorch (out, in) layout, no transpose)
    # b_ref: (1, tn)   o_ref: (tm, tn)
    # x @ W^T on the MXU: contract dim 1 of both operands (flash-attention's
    # q @ k^T pattern), f32 accumulation.
    acc = lax.dot_general(
        x_ref[...], w_ref[...],
        dimension_numbers=(((1,), (1,)), ((), ())),
        preferred_element_type=jnp.float32,
    )
    o_ref[...] = (acc + b_ref[...].astype(jnp.float32)).astype(o_ref.dtype)


def _vmem_budget_bytes():
    # Physical VMEM per core with ~25% headroom for compiler-internal scratch.
    try:
        phys = int(pltpu.get_tpu_info().vmem_capacity_bytes)
    except Exception:
        phys = 64 << 20  # conservative: v7x has 64 MiB per TensorCore
    return (phys * 3) // 4


@functools.partial(jax.jit, static_argnames=("state_dim",))
def predict_forward(s, a, weight, bias, state_dim):
    """Pallas equivalent of Predict.forward(s, a).

    s      : any shape whose total size is divisible by state_dim*4
    a      : unused (signature fidelity with the PyTorch module)
    weight : (out, in) = (state_dim*4, state_dim*4)  -- PyTorch convention
    bias   : (state_dim*4,)
    Output dtype follows s.dtype (f32 accumulation inside the kernel).
    """
    del a  # `a` is not used in the reference forward pass
    feat = state_dim * 4
    x = s.reshape(-1, feat)                      # glue: reshape in plain JAX
    B = x.shape[0]

    # Tiny / lane-misaligned feature dim: a fused XLA dot beats any standalone
    # kernel (masked partial stores + launch/DMA overhead dominate).
    if feat < 128 or feat % 128 != 0:
        y = jnp.dot(x, weight.T, preferred_element_type=jnp.float32) + bias
        return y.astype(x.dtype)

    x_item = jnp.dtype(x.dtype).itemsize
    w_item = jnp.dtype(weight.dtype).itemsize
    b_item = jnp.dtype(bias.dtype).itemsize
    budget = _vmem_budget_bytes()

    # ---- N tiling: keep the whole (feat, feat) weight resident (single
    # buffered) if it fits half the budget, otherwise tile the output dim so a
    # double-buffered (tn, feat) weight slab fits half the budget.
    if feat * feat * w_item <= budget // 2:
        tn = feat
        pinned_w = True
    else:
        tn = _round_down((budget // 2) // (2 * feat * w_item), 128)
        tn = int(max(128, min(feat, tn)))
        pinned_w = (tn == feat)
    grid_n = pl.cdiv(feat, tn)
    w_bufs = 1 if pinned_w else 2

    # ---- Batch tile: <= B (trailing ragged tile masked by Pallas), dtype-
    # aware sublane multiple, capped at 512 (multiple of 256 for the v6e/v7x
    # MXU), shrunk only if x/out double buffers would bust the VMEM budget.
    sub = {4: 8, 2: 16, 1: 32}.get(x_item, 8)
    if B <= sub:
        tm = B                                   # block == full dim: legal
    else:
        tm = min(512, _round_down(B, sub))
        w_bytes = w_bufs * tn * feat * w_item + 2 * tn * b_item
        tm_fit = (budget - w_bytes) // (2 * x_item * (feat + tn))
        tm = int(max(sub, min(tm, _round_down(tm_fit, sub))))
    grid_m = pl.cdiv(B, tm)

    b2d = bias.reshape(1, feat)

    # ---- VMEM budget (dtype-correct, real buffer counts) with 25% headroom.
    vmem_need = (2 * tm * feat * x_item            # x tiles, double-buffered
                 + 2 * tm * tn * x_item            # out tiles, double-buffered
                 + w_bufs * tn * feat * w_item     # weight slab(s)
                 + 2 * tn * b_item)                # bias slab(s)
    vmem_limit = int(min(max(vmem_need + vmem_need // 4, 4 << 20), budget))

    cost = pl.CostEstimate(
        flops=2 * B * feat * feat,
        bytes_accessed=(B * feat * x_item + feat * feat * w_item
                        + feat * b_item + B * feat * x_item),
        transcendentals=0,
    )

    # Grid is (N tiles, M tiles): N outermost so each weight slab is fetched
    # from HBM once; with grid_n == 1 the weight/bias blocks are fully pinned.
    x_spec = pl.BlockSpec((tm, feat), lambda j, i: (i, 0))
    if pinned_w:
        w_spec = pl.BlockSpec((tn, feat), lambda j, i: (j, 0),
                              pipeline_mode=pl.Buffered(1))
        b_spec = pl.BlockSpec((1, tn), lambda j, i: (0, j),
                              pipeline_mode=pl.Buffered(1))
    else:
        w_spec = pl.BlockSpec((tn, feat), lambda j, i: (j, 0))
        b_spec = pl.BlockSpec((1, tn), lambda j, i: (0, j))
    out_spec = pl.BlockSpec((tm, tn), lambda j, i: (i, j))

    out = pl.pallas_call(
        _linear_kernel,
        out_shape=jax.ShapeDtypeStruct((B, feat), x.dtype),
        grid=(grid_n, grid_m),
        in_specs=[x_spec, w_spec, b_spec],
        out_specs=out_spec,
        compiler_params=pltpu.CompilerParams(
            dimension_semantics=("parallel", "parallel"),
            vmem_limit_bytes=vmem_limit,
        ),
        cost_estimate=cost,
    )(x, weight, b2d)
    return out


def init_predict_params(state_dim, key):
    """Deterministic init matching nn.Linear's default U(-1/sqrt(in), 1/sqrt(in))."""
    feat = state_dim * 4
    kw, kb = jax.random.split(key)
    bound = 1.0 / jnp.sqrt(jnp.float32(feat))
    weight = jax.random.uniform(kw, (feat, feat), jnp.float32, -bound, bound)
    bias = jax.random.uniform(kb, (feat,), jnp.float32, -bound, bound)
    return weight, bias


if __name__ == "__main__":
    key = jax.random.PRNGKey(0)
    k_s, k_a, k_p, k_s2, k_a2, k_p2 = jax.random.split(key, 6)

    # --- Case 1: Pallas kernel path (feat = state_dim*4 = 128 -> lane-dense).
    state_dim, action_dim, batch = 32, 2, 2
    s = jax.random.normal(k_s, (batch, 4, state_dim), jnp.float32)
    a = jax.random.normal(k_a, (batch, action_dim), jnp.float32)  # unused in fwd
    weight, bias = init_predict_params(state_dim, k_p)

    out = jax.block_until_ready(predict_forward(s, a, weight, bias, state_dim))
    ref = jnp.dot(s.reshape(-1, state_dim * 4), weight.T,
                  precision=jax.lax.Precision.HIGHEST) + bias
    assert out.shape == (batch, state_dim * 4)
    assert jnp.allclose(out, ref, atol=1e-4, rtol=1e-4), \
        float(jnp.abs(out - ref).max())

    # --- Case 2: tiny feature dim (feat = 32 < 128) -> fused XLA dot fallback.
    state_dim2, batch2 = 8, 2
    s2 = jax.random.normal(k_s2, (batch2, 4, state_dim2), jnp.float32)
    a2 = jax.random.normal(k_a2, (batch2, action_dim), jnp.float32)
    w2, b2 = init_predict_params(state_dim2, k_p2)

    out2 = jax.block_until_ready(predict_forward(s2, a2, w2, b2, state_dim2))
    ref2 = jnp.dot(s2.reshape(-1, state_dim2 * 4), w2.T,
                   precision=jax.lax.Precision.HIGHEST) + b2
    assert out2.shape == (batch2, state_dim2 * 4)
    assert jnp.allclose(out2, ref2, atol=1e-4, rtol=1e-4)

    print("KERNEL_OK")
</pallas_src>

<mosaic_0001>
module attributes {stable_mosaic.version = 11 : i64} {
  func.func @_linear_kernel(%arg0: i32, %arg1: i32, %arg2: memref<2x128xf32, #tpu.memory_space<vmem>>, %arg3: memref<128x128xf32, #tpu.memory_space<vmem>>, %arg4: memref<1x128xf32, #tpu.memory_space<vmem>>, %arg5: memref<2x128xf32, #tpu.memory_space<vmem>>) attributes {dimension_semantics = [#tpu.dimension_semantics<parallel>, #tpu.dimension_semantics<parallel>], iteration_bounds = array<i64: 1, 1>, scalar_prefetch = 0 : i64, scratch_operands = 0 : i64, tpu.core_type = #tpu.core_type<tc>, window_params = [{transform_indices = @transform_0, window_bounds = array<i64: 2, 128>}, {pipeline_mode = #tpu.pipeline_mode<synchronous>, transform_indices = @transform_1, window_bounds = array<i64: 128, 128>}, {pipeline_mode = #tpu.pipeline_mode<synchronous>, transform_indices = @transform_2, window_bounds = array<i64: 1, 128>}, {transform_indices = @transform_3, window_bounds = array<i64: 2, 128>}]} {
    %c0 = arith.constant 0 : index
    %c0_0 = arith.constant 0 : index
    %0 = vector.load %arg2[%c0, %c0_0] : memref<2x128xf32, #tpu.memory_space<vmem>>, vector<2x128xf32>
    %c0_1 = arith.constant 0 : index
    %c0_2 = arith.constant 0 : index
    %1 = vector.load %arg3[%c0_1, %c0_2] : memref<128x128xf32, #tpu.memory_space<vmem>>, vector<128x128xf32>
    %cst = arith.constant dense<0.000000e+00> : vector<2x128xf32>
    %2 = tpu.matmul %0, %1, %cst {dimension_numbers = #tpu.dot_dimension_numbers<[1], [1], [0], [0], [0, 0, 1, 0], [], []>} : vector<2x128xf32>, vector<128x128xf32>, vector<2x128xf32> -> vector<2x128xf32>
    %c0_3 = arith.constant 0 : index
    %c0_4 = arith.constant 0 : index
    %3 = vector.load %arg4[%c0_3, %c0_4] : memref<1x128xf32, #tpu.memory_space<vmem>>, vector<1x128xf32>
    %4 = vector.broadcast %3 : vector<1x128xf32> to vector<2x128xf32>
    %5 = arith.addf %2, %4 : vector<2x128xf32>
    %c0_5 = arith.constant 0 : index
    %c0_6 = arith.constant 0 : index
    %6 = vector.load %arg5[%c0_5, %c0_6] : memref<2x128xf32, #tpu.memory_space<vmem>>, vector<2x128xf32>
    tpu.vector_store %arg5[%c0_5, %c0_6], %5 {strides = array<i32>} : memref<2x128xf32, #tpu.memory_space<vmem>>, vector<2x128xf32>,
    return
  }
  func.func @transform_0(%arg0: i32, %arg1: i32) -> (i32, i32) {
    %c0_i32 = arith.constant 0 : i32
    %c0_i32_0 = arith.constant 0 : i32
    return %arg1, %c0_i32 : i32, i32
  }
  func.func @transform_1(%arg0: i32, %arg1: i32) -> (i32, i32) {
    %c0_i32 = arith.constant 0 : i32
    %c0_i32_0 = arith.constant 0 : i32
    return %arg0, %c0_i32 : i32, i32
  }
  func.func @transform_2(%arg0: i32, %arg1: i32) -> (i32, i32) {
    %c0_i32 = arith.constant 0 : i32
    %c0_i32_0 = arith.constant 0 : i32
    return %c0_i32, %arg0 : i32, i32
  }
  func.func @transform_3(%arg0: i32, %arg1: i32) -> (i32, i32) {
    %c0_i32 = arith.constant 0 : i32
    return %arg1, %arg0 : i32, i32
  }
}

</mosaic_0001>

<llo_original>
// kernel: predict_forward.1
$region0: #{predict_forward.1}
  #allocation0 [shape = 'u32[]', space=smem, size = 0x4, offset = 0x4, fixed_abs, tag = 'smem constant byte address 0x4 - core index']
  #allocation1 [shape = 'u32[72,128]{1,0:T(1,128)}', space=vmem, size = 0x9000, scoped, tag = 'internal scratch']
  %s0 = inlined_call_operand.vmem [shape: f32[2,128], index: 0, kind: input, shape index: {}]
  %s1 = inlined_call_operand.hbm [shape: f32[128,128], index: 1, kind: input, shape index: {}]
  %s2 = inlined_call_operand.vmem [shape: f32[1,128], index: 2, kind: input, shape index: {}]
  %s3 = inlined_call_operand.hbm [shape: f32[2,128], index: 3, kind: output, shape index: {}]
  %s4 = sld [smem:[#allocation0]]
  $region26: #{predict_forward.1} parent=0
    _
  %s6 = ssub.s32 1, %s4
  %s7 = scalar_select 0, %s6, %s4
  $region1: #{predict_forward.1} parent=0
    #allocation2 [shape = 'u8[65536]{0}', space=vmem, size = 0x10000, scoped, tag = 'input window, operand 1, single buffered']
    #allocation3 [shape = 's32[1]{0}', space=sflag, size = 0x4, scoped, tag = 'scoped memory for predict_forward.1']
    #allocation4 [shape = 's32[1]{0}', space=sflag, size = 0x4, scoped, tag = 'scoped memory for predict_forward.1']
    #allocation5 [shape = 'u8[1024]{0}', space=vmem, size = 0x400, scoped, tag = 'output window, operand 0, single buffered']
    %8 = vsyncpa [#allocation3], 0
    %9 = vsyncpa [#allocation4], 0
    // Predicated region
    $region2: #{predict_forward.1} parent=1 // pred_check
      _
    $region3: #{predict_forward.1} parent=1 // pred_check_branch
      %11 = sbr.rel (0) target = $region5
    $region4: #{predict_forward.1} parent=1 // pred_region
      _
    $region5: #{predict_forward.1} parent=1 // pred_fallthru
      _
    // Predicated region
    $region6: #{predict_forward.1} parent=1 // pred_check
      _
    $region7: #{predict_forward.1} parent=1 // pred_check_branch
      %13 = sbr.rel (0) target = $region9
    $region8: #{predict_forward.1} parent=1 // pred_region
      %15 = vsyncadd [#allocation3], 0
      %s16 = sshll.u32 %s1, 4
      %s17 = int_to_ptr.hbm [resolvable:$true] %s16
      %s18 = sshll.u32 [#allocation2], 4
      %s19 = int_to_ptr.vmem [resolvable:$true] %s18
      %24 = dma.hbm_to_vmem [thread:$0]  %s17, 2048, %s19, [#allocation3], 128, 128, 8
    $region9: #{predict_forward.1} parent=1 // pred_fallthru
      _
    // Predicated region
    $region10: #{predict_forward.1} parent=1 // pred_check
      _
    $region11: #{predict_forward.1} parent=1 // pred_check_branch
      %26 = sbr.rel (0) target = $region13
    $region12: #{predict_forward.1} parent=1 // pred_region
      _
    $region13: #{predict_forward.1} parent=1 // pred_fallthru
      _
    // Predicated region
    $region14: #{predict_forward.1} parent=1 // pred_check
      _
    $region15: #{predict_forward.1} parent=1 // pred_check_branch
      %28 = sbr.rel (0) target = $region17
    $region16: #{predict_forward.1} parent=1 // pred_region
      %30 = dma.done [#allocation3], 2048
    $region17: #{predict_forward.1} parent=1 // pred_fallthru
      _
    %v31 = vld [vmem:[%s0] sm:$0x3]
    %v32 = vld [vmem:[#allocation2] sm:$0xff]
    %v33 = vld [vmem:[#allocation2 + $0x8] sm:$0xff]
    %v34 = vld [vmem:[#allocation2 + $0x10] sm:$0xff]
    %v35 = vld [vmem:[#allocation2 + $0x18] sm:$0xff]
    %v36 = vld [vmem:[#allocation2 + $0x20] sm:$0xff]
    %v37 = vld [vmem:[#allocation2 + $0x28] sm:$0xff]
    %v38 = vld [vmem:[#allocation2 + $0x30] sm:$0xff]
    %v39 = vld [vmem:[#allocation2 + $0x38] sm:$0xff]
    %v40 = vld [vmem:[#allocation2 + $0x40] sm:$0xff]
    %v41 = vld [vmem:[#allocation2 + $0x48] sm:$0xff]
    %v42 = vld [vmem:[#allocation2 + $0x50] sm:$0xff]
    %v43 = vld [vmem:[#allocation2 + $0x58] sm:$0xff]
    %v44 = vld [vmem:[#allocation2 + $0x60] sm:$0xff]
    %v45 = vld [vmem:[#allocation2 + $0x68] sm:$0xff]
    %v46 = vld [vmem:[#allocation2 + $0x70] sm:$0xff]
    %v47 = vld [vmem:[#allocation2 + $0x78] sm:$0xff]
    %v48 = vld [vmem:[%s2] sm:$0x1]
    %v50 = vperm.slane %v48, 0
    %52 = vmatpush.xpose.msra.mxu0 %v47
    %53 = vmatpush.xpose.msra.mxu0 %v46
    %54 = vmatpush.xpose.msra.mxu0 %v45
    %55 = vmatpush.xpose.msra.mxu0 %v44
    %56 = vmatpush.xpose.msra.mxu0 %v43
    %57 = vmatpush.xpose.msra.mxu0 %v42
    %58 = vmatpush.xpose.msra.mxu0 %v41
    %59 = vmatpush.xpose.msra.mxu0 %v40
    %60 = vmatpush.xpose.msra.mxu0 %v39
    %61 = vmatpush.xpose.msra.mxu0 %v38
    %62 = vmatpush.xpose.msra.mxu0 %v37
    %63 = vmatpush.xpose.msra.mxu0 %v36
    %64 = vmatpush.xpose.msra.mxu0 %v35
    %65 = vmatpush.xpose.msra.mxu0 %v34
    %66 = vmatpush.xpose.msra.mxu0 %v33
    %67 = vmatpush.xpose.msra.mxu0 %v32
    %68 = vmatmul.f32.gmra.mxu0 %v31
    %v69 = vpop.f32.mrf.mxu0
    %v70 = vadd.f32 %v50, %v69
    %71 = vdwg.mxu0
    %72 = vst [vmem:[#allocation5] sm:$0x3] %v70
    // Predicated region
    $region18: #{predict_forward.1} parent=1 // pred_check
      _
    $region19: #{predict_forward.1} parent=1 // pred_check_branch
      %74 = sbr.rel (0) target = $region21
    $region20: #{predict_forward.1} parent=1 // pred_region
      %76 = vsyncadd [#allocation4], 0
      %s78 = sshll.u32 [#allocation5], 4
      %s79 = int_to_ptr.vmem [resolvable:$true] %s78
      %s80 = sshll.u32 %s3, 4
      %s81 = int_to_ptr.hbm [resolvable:$true] %s80
      %83 = dma.vmem_to_hbm [thread:$0]  %s79, 32, %s81, [#allocation4]
    $region21: #{predict_forward.1} parent=1 // pred_fallthru
      _
    // Predicated region
    $region22: #{predict_forward.1} parent=1 // pred_check
      _
    $region23: #{predict_forward.1} parent=1 // pred_check_branch
      %85 = sbr.rel (0) target = $region25
    $region24: #{predict_forward.1} parent=1 // pred_region
      %87 = dma.done [#allocation4], 32
    $region25: #{predict_forward.1} parent=1 // pred_fallthru
      _
    %88 = vsyncpa [#allocation3], 1
    %89 = vsyncpa [#allocation4], 1

</llo_original>
